<compile_context>
chip_gen: v6e
topology: v6e:2x2x1
jax: 0.10.0
libtpu: 0.0.40
codegen_flags: <defaults>
</compile_context>

<pallas_src>
import math
import jax
import jax.numpy as jnp
from jax.experimental import pallas as pl
from jax.experimental.pallas import tpu as pltpu

_SQRT_2_OVER_PI = math.sqrt(2.0 / math.pi)


def _round_up(x, m):
    return ((x + m - 1) // m) * m


def _pick_divisor_tile(total, target, multiple):
    """Largest t <= target that divides `total` and is a multiple of `multiple`;
    falls back to `total` (full extent is always a legal block)."""
    t = min(target, total)
    t = (t // multiple) * multiple
    while t >= multiple:
        if total % t == 0:
            return t
        t -= multiple
    return total


def _vmem_capacity_bytes():
    """Per-core VMEM capacity; conservative (v7x = 64 MiB) if query fails."""
    try:
        info = pltpu.get_tpu_info()
        cap = getattr(info, "vmem_capacity_bytes", None)
        if cap:
            return int(cap)
    except Exception:
        pass
    return 64 * 1024 * 1024


def _vmem_estimate(tm, th, d, weight_buffers):
    """Rough per-step VMEM footprint (bytes) of the pipelined buffers."""
    wb = weight_buffers if weight_buffers else 2
    return (2 * tm * d * 2          # x tile, bf16, double-buffered
            + 2 * tm * d * 4        # resident f32 output tile (revisited)
            + 4 * wb * d * th       # wfc (D,th) + wproj (th,D) bf16 slices
            + 4 * (th + d) * 4)     # bias slices (f32), tiny


def mlp_kernel(x_ref, wfc_ref, bfc_ref, wproj_ref, bproj_ref, o_ref):
    # x_ref:     (tm, D)  bf16 input rows   (block index constant across h)
    # wfc_ref:   (D, th)  bf16 c_fc weight slice
    # bfc_ref:   (1, th)  f32  c_fc bias slice
    # wproj_ref: (th, D)  bf16 c_proj weight slice
    # bproj_ref: (1, D)   f32  c_proj bias
    # o_ref:     (tm, D)  f32 output tile; VMEM-resident across h (index (i,0)
    #            is constant along the reduction axis) -> used as accumulator.
    h_idx = pl.program_id(1)

    @pl.when(h_idx == 0)
    def _():
        o_ref[...] = jnp.zeros_like(o_ref)

    # c_fc slice: (tm, D) @ (D, th) on the MXU, f32 accumulate, + bias slice.
    h = jnp.dot(x_ref[...], wfc_ref[...],
                preferred_element_type=jnp.float32) + bfc_ref[...]

    # GELU, tanh approximation (torch.nn.GELU(approximate='tanh')), in f32.
    # tanh rides the EUP slot; factored to minimize VPU multiplies.
    h2 = h * h
    inner = h * (1.0 + 0.044715 * h2)
    g = 0.5 * h * (1.0 + jnp.tanh(_SQRT_2_OVER_PI * inner))

    # Partial c_proj contribution of this hidden slice, accumulated in f32
    # directly into the resident output tile.
    o_ref[...] += jnp.dot(g.astype(wproj_ref.dtype), wproj_ref[...],
                          preferred_element_type=jnp.float32)

    @pl.when(h_idx == pl.num_programs(1) - 1)
    def _():
        o_ref[...] += bproj_ref[...]


def prepare_mlp_params(w_fc, b_fc, w_proj, b_proj):
    """Cast / reshape parameters ONCE (outside the per-call path) so the
    kernel streams bf16 weights with no per-call f32->bf16 HBM pass."""
    return (jnp.asarray(w_fc, jnp.bfloat16),
            jnp.asarray(b_fc, jnp.float32).reshape(1, -1),
            jnp.asarray(w_proj, jnp.bfloat16),
            jnp.asarray(b_proj, jnp.float32).reshape(1, -1))


def mlp_pallas(x, w_fc, b_fc, w_proj, b_proj, *, tm=None, th=None,
               weight_buffers=None, vmem_limit_bytes=None):
    """x: (B, T, D). Weights pre-transposed vs nn.Linear: w_fc: (D, 4D),
    w_proj: (4D, D) — ideally already prepared via prepare_mlp_params().
    Returns (B, T, D) in x.dtype."""
    B, T, D = x.shape
    M = B * T

    # Accept unprepared params (cast once here) but prefer pre-prepared bf16.
    if (w_fc.dtype != jnp.bfloat16 or w_proj.dtype != jnp.bfloat16
            or b_fc.ndim != 2 or b_proj.ndim != 2):
        w_fc, b_fc, w_proj, b_proj = prepare_mlp_params(w_fc, b_fc, w_proj, b_proj)
    H = w_fc.shape[1]

    # ---- generation-tuned defaults ------------------------------------
    cap = _vmem_capacity_bytes()
    big_vmem = cap > (96 << 20)          # v5e / v6e (128 MiB) vs v7x (64 MiB)
    if tm is None:
        tm = 1024 if big_vmem else 512   # tm == FLOPs per weight byte
    if th is None:
        th = 1024 if big_vmem else 512
    if vmem_limit_bytes is None:
        vmem_limit_bytes = min(int(cap * 0.85), 100 * 1024 * 1024)

    # ---- tile sizing ----------------------------------------------------
    # Clamp to problem size (16-row multiples: bf16 packs 16 rows per vreg).
    tm = min(tm, _round_up(M, 16))
    # Keep >= 2 row tiles when M is large enough so the "parallel" row axis
    # can split across both TensorCores on v7x (harmless on 1-TC chips).
    if M > 256 and _round_up(M, tm) // tm < 2:
        tm = _round_up(-(-M // 2), 16)
    th = _pick_divisor_tile(H, th, 128)

    # Shrink tiles if the pipelined buffers would not fit the VMEM budget.
    budget = int(vmem_limit_bytes * 0.9)
    while _vmem_estimate(tm, th, D, weight_buffers) > budget and th > 128:
        new_th = _pick_divisor_tile(H, th // 2, 128)
        if new_th >= th:
            break
        th = new_th
    while _vmem_estimate(tm, th, D, weight_buffers) > budget and tm > 256:
        tm = max(256, tm // 2)

    M_pad = _round_up(M, tm)

    x2 = x.reshape(M, D)
    if M_pad != M:
        x2 = jnp.pad(x2, ((0, M_pad - M), (0, 0)))
    x2 = x2.astype(jnp.bfloat16)

    grid = (M_pad // tm, H // th)
    w_mode = pl.Buffered(weight_buffers) if weight_buffers else None

    out = pl.pallas_call(
        mlp_kernel,
        out_shape=jax.ShapeDtypeStruct((M_pad, D), jnp.float32),
        grid_spec=pltpu.PrefetchScalarGridSpec(
            num_scalar_prefetch=0,
            grid=grid,
            in_specs=[
                pl.BlockSpec((tm, D), lambda i, h: (i, 0)),   # x rows (const in h)
                pl.BlockSpec((D, th), lambda i, h: (0, h),    # c_fc weight slice
                             pipeline_mode=w_mode),
                pl.BlockSpec((1, th), lambda i, h: (0, h)),   # c_fc bias slice
                pl.BlockSpec((th, D), lambda i, h: (h, 0),    # c_proj weight slice
                             pipeline_mode=w_mode),
                pl.BlockSpec((1, D), lambda i, h: (0, 0)),    # c_proj bias
            ],
            out_specs=pl.BlockSpec((tm, D), lambda i, h: (i, 0)),
        ),
        compiler_params=pltpu.CompilerParams(
            dimension_semantics=("parallel", "arbitrary"),
            vmem_limit_bytes=vmem_limit_bytes,
        ),
    )(x2, w_fc, b_fc, w_proj, b_proj)

    return out[:M].reshape(B, T, D).astype(x.dtype)


def mlp_reference(x, w_fc, b_fc, w_proj, b_proj):
    h = jnp.einsum("btd,dh->bth", x, w_fc) + b_fc
    c = math.sqrt(2.0 / math.pi)
    g = 0.5 * h * (1.0 + jnp.tanh(c * (h + 0.044715 * h ** 3)))
    return jnp.einsum("bth,hd->btd", g, w_proj) + b_proj


if __name__ == "__main__":
    # Small GPT-2-style config: batch=2, seq=8, n_embd=32 -> hidden=128.
    # NOTE: real GPT-2 dims (D, H multiples of 128) are the lane-dense case
    # this kernel is tuned for; this toy shape only checks correctness.
    B, T, D = 2, 8, 32
    H = 4 * D

    key = jax.random.PRNGKey(0)
    kx, k1, k2, k3, k4 = jax.random.split(key, 5)

    x = jax.random.normal(kx, (B, T, D), dtype=jnp.float32)
    # Parameters stored pre-transposed for the x @ W convention.
    w_fc = jax.random.normal(k1, (D, H), dtype=jnp.float32) * 0.02
    b_fc = jax.random.normal(k2, (H,), dtype=jnp.float32) * 0.02
    w_proj = jax.random.normal(k3, (H, D), dtype=jnp.float32) * 0.02
    b_proj = jax.random.normal(k4, (D,), dtype=jnp.float32) * 0.02

    # Cast weights to bf16 ONCE (no per-call f32->bf16 weight pass).
    params = prepare_mlp_params(w_fc, b_fc, w_proj, b_proj)

    y = mlp_pallas(x, *params)
    y = jax.block_until_ready(y)

    y_ref = mlp_reference(x, w_fc, b_fc, w_proj, b_proj)
    assert y.shape == (B, T, D)
    # Tolerance loosened for bf16 matmul operands (f32 accumulation).
    assert jnp.allclose(y, y_ref, atol=3e-3, rtol=3e-2), (
        "mismatch vs reference, max abs diff = %e" % float(jnp.max(jnp.abs(y - y_ref))))

    print("KERNEL_OK")
</pallas_src>

<mosaic_0001>
module attributes {stable_mosaic.version = 11 : i64} {
  func.func @mlp_kernel(%arg0: i32, %arg1: i32, %arg2: memref<16x32xbf16, #tpu.memory_space<vmem>>, %arg3: memref<32x128xbf16, #tpu.memory_space<vmem>>, %arg4: memref<1x128xf32, #tpu.memory_space<vmem>>, %arg5: memref<128x32xbf16, #tpu.memory_space<vmem>>, %arg6: memref<1x32xf32, #tpu.memory_space<vmem>>, %arg7: memref<16x32xf32, #tpu.memory_space<vmem>>) attributes {dimension_semantics = [#tpu.dimension_semantics<parallel>, #tpu.dimension_semantics<arbitrary>], iteration_bounds = array<i64: 1, 1>, scalar_prefetch = 0 : i64, scratch_operands = 0 : i64, tpu.core_type = #tpu.core_type<tc>, window_params = [{transform_indices = @transform_0, window_bounds = array<i64: 16, 32>}, {transform_indices = @transform_1, window_bounds = array<i64: 32, 128>}, {transform_indices = @transform_2, window_bounds = array<i64: 1, 128>}, {transform_indices = @transform_3, window_bounds = array<i64: 128, 32>}, {pipeline_mode = #tpu.pipeline_mode<synchronous>, transform_indices = @transform_4, window_bounds = array<i64: 1, 32>}, {transform_indices = @transform_5, window_bounds = array<i64: 16, 32>}]} {
    %c0_i32 = arith.constant 0 : i32
    %0 = arith.cmpi eq, %arg1, %c0_i32 : i32
    %1 = arith.extui %0 : i1 to i32
    %c0_i32_0 = arith.constant 0 : i32
    %2 = arith.cmpi ne, %1, %c0_i32_0 : i32
    scf.if %2 {
      %cst_20 = arith.constant 0.000000e+00 : f32
      %32 = vector.broadcast %cst_20 : f32 to vector<16x32xf32>
      %c0_21 = arith.constant 0 : index
      %c0_22 = arith.constant 0 : index
      %33 = vector.load %arg7[%c0_21, %c0_22] : memref<16x32xf32, #tpu.memory_space<vmem>>, vector<16x32xf32>
      tpu.vector_store %arg7[%c0_21, %c0_22], %32 {strides = array<i32>} : memref<16x32xf32, #tpu.memory_space<vmem>>, vector<16x32xf32>,
    } else {
    }
    %c0 = arith.constant 0 : index
    %c0_1 = arith.constant 0 : index
    %3 = vector.load %arg2[%c0, %c0_1] : memref<16x32xbf16, #tpu.memory_space<vmem>>, vector<16x32xbf16>
    %c0_2 = arith.constant 0 : index
    %c0_3 = arith.constant 0 : index
    %4 = vector.load %arg3[%c0_2, %c0_3] : memref<32x128xbf16, #tpu.memory_space<vmem>>, vector<32x128xbf16>
    %cst = arith.constant dense<0.000000e+00> : vector<16x128xf32>
    %5 = tpu.matmul %3, %4, %cst {dimension_numbers = #tpu.dot_dimension_numbers<[1], [0], [0], [1], [0, 0, 1, 1], [], []>} : vector<16x32xbf16>, vector<32x128xbf16>, vector<16x128xf32> -> vector<16x128xf32>
    %c0_4 = arith.constant 0 : index
    %c0_5 = arith.constant 0 : index
    %6 = vector.load %arg4[%c0_4, %c0_5] : memref<1x128xf32, #tpu.memory_space<vmem>>, vector<1x128xf32>
    %7 = vector.broadcast %6 : vector<1x128xf32> to vector<16x128xf32>
    %8 = arith.addf %5, %7 : vector<16x128xf32>
    %9 = arith.mulf %8, %8 : vector<16x128xf32>
    %cst_6 = arith.constant 4.471500e-02 : f32
    %10 = vector.broadcast %cst_6 : f32 to vector<16x128xf32>
    %11 = arith.mulf %10, %9 : vector<16x128xf32>
    %cst_7 = arith.constant 1.000000e+00 : f32
    %12 = vector.broadcast %cst_7 : f32 to vector<16x128xf32>
    %13 = arith.addf %12, %11 : vector<16x128xf32>
    %14 = arith.mulf %8, %13 : vector<16x128xf32>
    %cst_8 = arith.constant 5.000000e-01 : f32
    %15 = vector.broadcast %cst_8 : f32 to vector<16x128xf32>
    %16 = arith.mulf %15, %8 : vector<16x128xf32>
    %cst_9 = arith.constant 0.797884583 : f32
    %17 = vector.broadcast %cst_9 : f32 to vector<16x128xf32>
    %18 = arith.mulf %17, %14 : vector<16x128xf32>
    %19 = math.tanh %18 : vector<16x128xf32>
    %cst_10 = arith.constant 1.000000e+00 : f32
    %20 = vector.broadcast %cst_10 : f32 to vector<16x128xf32>
    %21 = arith.addf %20, %19 : vector<16x128xf32>
    %22 = arith.mulf %16, %21 : vector<16x128xf32>
    %c0_11 = arith.constant 0 : index
    %c0_12 = arith.constant 0 : index
    %23 = vector.load %arg7[%c0_11, %c0_12] : memref<16x32xf32, #tpu.memory_space<vmem>>, vector<16x32xf32>
    %24 = arith.truncf %22 : vector<16x128xf32> to vector<16x128xbf16>
    %c0_13 = arith.constant 0 : index
    %c0_14 = arith.constant 0 : index
    %25 = vector.load %arg5[%c0_13, %c0_14] : memref<128x32xbf16, #tpu.memory_space<vmem>>, vector<128x32xbf16>
    %cst_15 = arith.constant dense<0.000000e+00> : vector<16x32xf32>
    %26 = tpu.matmul %24, %25, %cst_15 {dimension_numbers = #tpu.dot_dimension_numbers<[1], [0], [0], [1], [0, 0, 1, 1], [], []>} : vector<16x128xbf16>, vector<128x32xbf16>, vector<16x32xf32> -> vector<16x32xf32>
    %27 = arith.addf %23, %26 : vector<16x32xf32>
    %c0_16 = arith.constant 0 : index
    %c0_17 = arith.constant 0 : index
    %28 = vector.load %arg7[%c0_16, %c0_17] : memref<16x32xf32, #tpu.memory_space<vmem>>, vector<16x32xf32>
    tpu.vector_store %arg7[%c0_16, %c0_17], %27 {strides = array<i32>} : memref<16x32xf32, #tpu.memory_space<vmem>>, vector<16x32xf32>,
    %c0_i32_18 = arith.constant 0 : i32
    %29 = arith.cmpi eq, %arg1, %c0_i32_18 : i32
    %30 = arith.extui %29 : i1 to i32
    %c0_i32_19 = arith.constant 0 : i32
    %31 = arith.cmpi ne, %30, %c0_i32_19 : i32
    scf.if %31 {
      %c0_20 = arith.constant 0 : index
      %c0_21 = arith.constant 0 : index
      %32 = vector.load %arg7[%c0_20, %c0_21] : memref<16x32xf32, #tpu.memory_space<vmem>>, vector<16x32xf32>
      %c0_22 = arith.constant 0 : index
      %c0_23 = arith.constant 0 : index
      %33 = vector.load %arg6[%c0_22, %c0_23] : memref<1x32xf32, #tpu.memory_space<vmem>>, vector<1x32xf32>
      %34 = vector.broadcast %33 : vector<1x32xf32> to vector<16x32xf32>
      %35 = arith.addf %32, %34 : vector<16x32xf32>
      %c0_24 = arith.constant 0 : index
      %c0_25 = arith.constant 0 : index
      %36 = vector.load %arg7[%c0_24, %c0_25] : memref<16x32xf32, #tpu.memory_space<vmem>>, vector<16x32xf32>
      tpu.vector_store %arg7[%c0_24, %c0_25], %35 {strides = array<i32>} : memref<16x32xf32, #tpu.memory_space<vmem>>, vector<16x32xf32>,
    } else {
    }
    return
  }
  func.func @transform_0(%arg0: i32, %arg1: i32) -> (i32, i32) {
    %c0_i32 = arith.constant 0 : i32
    %c0_i32_0 = arith.constant 0 : i32
    return %arg0, %c0_i32 : i32, i32
  }
  func.func @transform_1(%arg0: i32, %arg1: i32) -> (i32, i32) {
    %c0_i32 = arith.constant 0 : i32
    %c0_i32_0 = arith.constant 0 : i32
    return %c0_i32, %arg1 : i32, i32
  }
  func.func @transform_2(%arg0: i32, %arg1: i32) -> (i32, i32) {
    %c0_i32 = arith.constant 0 : i32
    %c0_i32_0 = arith.constant 0 : i32
    return %c0_i32, %arg1 : i32, i32
  }
  func.func @transform_3(%arg0: i32, %arg1: i32) -> (i32, i32) {
    %c0_i32 = arith.constant 0 : i32
    %c0_i32_0 = arith.constant 0 : i32
    return %arg1, %c0_i32 : i32, i32
  }
  func.func @transform_4(%arg0: i32, %arg1: i32) -> (i32, i32) {
    %c0_i32 = arith.constant 0 : i32
    %c0_i32_0 = arith.constant 0 : i32
    %c0_i32_1 = arith.constant 0 : i32
    return %c0_i32, %c0_i32_0 : i32, i32
  }
  func.func @transform_5(%arg0: i32, %arg1: i32) -> (i32, i32) {
    %c0_i32 = arith.constant 0 : i32
    %c0_i32_0 = arith.constant 0 : i32
    return %arg0, %c0_i32 : i32, i32
  }
}

</mosaic_0001>

<llo_original>
// kernel: tpu_custom_call.1
$region0: #{tpu_custom_call.1}
  #allocation0 [shape = 'u32[]', space=smem, size = 0x4, offset = 0x4, fixed_abs, tag = 'smem constant byte address 0x4 - core index']
  #allocation1 [shape = 'u32[144,128]{1,0:T(1,128)}', space=vmem, size = 0x12000, scoped, tag = 'internal scratch']
  %s0 = inlined_call_operand.vmem [shape: bf16[16,32], index: 0, kind: input, shape index: {}]
  %s1 = inlined_call_operand.vmem [shape: bf16[32,128], index: 1, kind: input, shape index: {}]
  %s2 = inlined_call_operand.vmem [shape: f32[1,128], index: 2, kind: input, shape index: {}]
  %s3 = inlined_call_operand.vmem [shape: bf16[128,32], index: 3, kind: input, shape index: {}]
  %s4 = inlined_call_operand.vmem [shape: f32[1,32], index: 4, kind: input, shape index: {}]
  %s5 = inlined_call_operand.hbm [shape: f32[16,32], index: 5, kind: output, shape index: {}]
  %s6 = sld [smem:[#allocation0]]
  $region38: #{tpu_custom_call.1} parent=0
    _
  %s8 = ssub.s32 1, %s6
  %s9 = scalar_select 0, %s8, %s6
  $region1: #{tpu_custom_call.1} parent=0
    #allocation2 [shape = 'u8[8192]{0}', space=vmem, size = 0x2000, scoped, tag = 'output window, operand 0, single buffered']
    #allocation3 [shape = 's32[1]{0}', space=sflag, size = 0x4, scoped, tag = 'scoped memory for tpu_custom_call.1']
    %10 = vsyncpa [#allocation3], 0
    // Predicated region
    $region2: #{tpu_custom_call.1} parent=1 // pred_check
      _
    $region3: #{tpu_custom_call.1} parent=1 // pred_check_branch
      %12 = sbr.rel (0) target = $region5
    $region4: #{tpu_custom_call.1} parent=1 // pred_region
      _
    $region5: #{tpu_custom_call.1} parent=1 // pred_fallthru
      _
    // Predicated region
    $region6: #{tpu_custom_call.1} parent=1 // pred_check
      _
    $region7: #{tpu_custom_call.1} parent=1 // pred_check_branch
      %14 = sbr.rel (0) target = $region9
    $region8: #{tpu_custom_call.1} parent=1 // pred_region
      _
    $region9: #{tpu_custom_call.1} parent=1 // pred_fallthru
      _
    // Predicated region
    $region10: #{tpu_custom_call.1} parent=1 // pred_check
      _
    $region11: #{tpu_custom_call.1} parent=1 // pred_check_branch
      %16 = sbr.rel (0) target = $region13
    $region12: #{tpu_custom_call.1} parent=1 // pred_region
      _
    $region13: #{tpu_custom_call.1} parent=1 // pred_fallthru
      _
    // Predicated region
    $region14: #{tpu_custom_call.1} parent=1 // pred_check
      _
    $region15: #{tpu_custom_call.1} parent=1 // pred_check_branch
      %18 = sbr.rel (0) target = $region17
    $region16: #{tpu_custom_call.1} parent=1 // pred_region
      _
    $region17: #{tpu_custom_call.1} parent=1 // pred_fallthru
      _
    // Predicated region
    $region18: #{tpu_custom_call.1} parent=1 // pred_check
      _
    $region19: #{tpu_custom_call.1} parent=1 // pred_check_branch
      %20 = sbr.rel (0) target = $region21
    $region20: #{tpu_custom_call.1} parent=1 // pred_region
      _
    $region21: #{tpu_custom_call.1} parent=1 // pred_fallthru
      _
    %p22 = scmp.eq.s32.totalorder 0, 0
    // Predicated region
    $region22: #{tpu_custom_call.1} parent=1 // pred_check
      %p23 = pneg %p22
    $region23: #{tpu_custom_call.1} parent=1 // pred_check_branch
      %25 = sbr.rel (%p23) target = $region25
    $region24: #{tpu_custom_call.1} parent=1 // pred_region
      %vm26 = vcmask 261120
      %27 = vst.msk [vmem:[#allocation2] sm:$0xff] %vm26, 0.0
      %28 = vst.msk [vmem:[#allocation2 + $0x8] sm:$0xff] %vm26, 0.0
    $region25: #{tpu_custom_call.1} parent=1 // pred_fallthru
      _
    %v29 = vld [vmem:[%s0] sm:$0xf]
    %v30 = vld [vmem:[%s0 + $0x4] sm:$0xf]
    %v31 = vld [vmem:[%s1] sm:$0xf]
    %v32 = vld [vmem:[%s1 + $0x4] sm:$0xf]
    %v33 = vld [vmem:[%s1 + $0x8] sm:$0xf]
    %v34 = vld [vmem:[%s1 + $0xc] sm:$0xf]
    %v35 = vld [vmem:[%s2] sm:$0x1]
    %v37 = vlaneseq
    %v38 = vshrl.u32 %v37, 7
    %v39 = vsub.s32 0, %v38
    %v40 = vrot.slane %v35, %v39
    %v44 = vunpack.c.l.b16 %v29
    %v45 = vunpack.c.l.b16 %v30
    %v46 = vpack.c.b16 %v45, %v44
    %v51 = vunpack.c.l.b16 %v31
    %v52 = vunpack.c.l.b16 %v32
    %v53 = vunpack.c.l.b16 %v33
    %v54 = vunpack.c.l.b16 %v34
    %v55 = vpack.c.b16 %v52, %v51
    %v56 = vpack.c.b16 %v54, %v53
    %vm59 = vcmask 261120
    %v61 = vsel %vm59, %v46, 0
    %63 = vmatprep.subr.bf16.mxu0 0
    %64 = vmatpush1.bf16.msra.mxu0 0
    %65 = vmatprep.subr.bf16.mxu0 0
    %66 = vmatpush1.bf16.msra.mxu0 0
    %67 = vmatprep.subr.bf16.mxu0 0
    %68 = vmatpush1.bf16.msra.mxu0 0
    %69 = vmatprep.subr.bf16.mxu0 0
    %70 = vmatpush1.bf16.msra.mxu0 0
    %71 = vmatprep.subr.bf16.mxu0 0
    %72 = vmatpush1.bf16.msra.mxu0 0
    %73 = vmatprep.subr.bf16.mxu0 0
    %74 = vmatpush1.bf16.msra.mxu0 0
    %75 = vmatprep.subr.bf16.mxu0 0
    %76 = vmatpush1.bf16.msra.mxu0 %v56
    %77 = vmatprep.subr.bf16.mxu0 0
    %78 = vmatpush1.bf16.msra.mxu0 %v55
    %79 = vmatprep.subr.bf16.mxu0 0
    %80 = vmatpush2.bf16.msra.mxu0 0
    %81 = vmatprep.subr.bf16.mxu0 0
    %82 = vmatpush2.bf16.msra.mxu0 0
    %83 = vmatprep.subr.bf16.mxu0 0
    %84 = vmatpush2.bf16.msra.mxu0 0
    %85 = vmatprep.subr.bf16.mxu0 0
    %86 = vmatpush2.bf16.msra.mxu0 0
    %87 = vmatprep.subr.bf16.mxu0 0
    %88 = vmatpush2.bf16.msra.mxu0 0
    %89 = vmatprep.subr.bf16.mxu0 0
    %90 = vmatpush2.bf16.msra.mxu0 0
    %91 = vmatprep.subr.bf16.mxu0 0
    %92 = vmatpush2.bf16.msra.mxu0 0
    %93 = vmatprep.subr.bf16.mxu0 0
    %94 = vmatpush2.bf16.msra.mxu0 0
    %95 = vmatprep.mubr.bf16.mxu0 0
    %96 = vmatmul.mubr.bf16.gmra.mxu0 %v61
    %v97 = vpop.f32.mrf.mxu0
    %v98 = vadd.f32 %v40, %v97
    %v99 = vpop.f32.mrf.mxu0
    %v100 = vpop.f32.mrf.mxu0
    %v101 = vadd.f32 %v40, %v100
    %v102 = vpop.f32.mrf.mxu0
    %103 = vdwg.mxu0
    %v104 = vmul.f32 %v98, %v98
    %v105 = vmul.f32 %v101, %v101
    %v106 = vmul.f32 %v104, 0.044715
    %v107 = vmul.f32 %v105, 0.044715
    %v108 = vadd.f32 %v106, 1.0
    %v109 = vadd.f32 %v107, 1.0
    %v110 = vmul.f32 %v98, %v108
    %v111 = vmul.f32 %v101, %v109
    %v112 = vmul.f32 %v98, 0.5
    %v113 = vmul.f32 %v101, 0.5
    %v114 = vmul.f32 %v110, 0.7978846
    %v115 = vmul.f32 %v111, 0.7978846
    %v116 = vtanh.pop %v114
    %v117 = vtanh.pop %v115
    %v118 = vadd.f32 %v116, 1.0
    %v119 = vadd.f32 %v117, 1.0
    %v120 = vmul.f32 %v112, %v118
    %v121 = vmul.f32 %v113, %v119
    %v122 = vld [vmem:[#allocation2] sm:$0xff]
    %v123 = vld [vmem:[#allocation2 + $0x8] sm:$0xff]
    %v124 = vpack.c.bf16 %v121, %v120
    %v125 = vld [vmem:[%s3] sm:$0xf]
    %v126 = vld [vmem:[%s3 + $0x4] sm:$0xf]
    %v127 = vld [vmem:[%s3 + $0x8] sm:$0xf]
    %v128 = vld [vmem:[%s3 + $0xc] sm:$0xf]
    %v129 = vld [vmem:[%s3 + $0x10] sm:$0xf]
    %v130 = vld [vmem:[%s3 + $0x14] sm:$0xf]
    %v131 = vld [vmem:[%s3 + $0x18] sm:$0xf]
    %v132 = vld [vmem:[%s3 + $0x1c] sm:$0xf]
    %v133 = vld [vmem:[%s3 + $0x20] sm:$0xf]
    %v134 = vld [vmem:[%s3 + $0x24] sm:$0xf]
    %v135 = vld [vmem:[%s3 + $0x28] sm:$0xf]
    %v136 = vld [vmem:[%s3 + $0x2c] sm:$0xf]
    %v137 = vld [vmem:[%s3 + $0x30] sm:$0xf]
    %v138 = vld [vmem:[%s3 + $0x34] sm:$0xf]
    %v139 = vld [vmem:[%s3 + $0x38] sm:$0xf]
    %v140 = vld [vmem:[%s3 + $0x3c] sm:$0xf]
    %v157 = vunpack.c.l.b16 %v125
    %v158 = vunpack.c.l.b16 %v126
    %v159 = vunpack.c.l.b16 %v127
    %v160 = vunpack.c.l.b16 %v128
    %v161 = vunpack.c.l.b16 %v129
    %v162 = vunpack.c.l.b16 %v130
    %v163 = vunpack.c.l.b16 %v131
    %v164 = vunpack.c.l.b16 %v132
    %v165 = vunpack.c.l.b16 %v133
    %v166 = vunpack.c.l.b16 %v134
    %v167 = vunpack.c.l.b16 %v135
    %v168 = vunpack.c.l.b16 %v136
    %v169 = vunpack.c.l.b16 %v137
    %v170 = vunpack.c.l.b16 %v138
    %v171 = vunpack.c.l.b16 %v139
    %v172 = vunpack.c.l.b16 %v140
    %v173 = vpack.c.b16 %v158, %v157
    %v174 = vpack.c.b16 %v160, %v159
    %v175 = vpack.c.b16 %v162, %v161
    %v176 = vpack.c.b16 %v164, %v163
    %v177 = vpack.c.b16 %v166, %v165
    %v178 = vpack.c.b16 %v168, %v167
    %v179 = vpack.c.b16 %v170, %v169
    %v180 = vpack.c.b16 %v172, %v171
    %189 = vmatprep.subr.bf16.mxu0 0
    %190 = vmatpush1.bf16.msra.mxu0 %v180
    %191 = vmatprep.subr.bf16.mxu0 0
    %192 = vmatpush1.bf16.msra.mxu0 %v179
    %193 = vmatprep.subr.bf16.mxu0 0
    %194 = vmatpush1.bf16.msra.mxu0 %v178
    %195 = vmatprep.subr.bf16.mxu0 0
    %196 = vmatpush1.bf16.msra.mxu0 %v177
    %197 = vmatprep.subr.bf16.mxu0 0
    %198 = vmatpush1.bf16.msra.mxu0 %v176
    %199 = vmatprep.subr.bf16.mxu0 0
    %200 = vmatpush1.bf16.msra.mxu0 %v175
    %201 = vmatprep.subr.bf16.mxu0 0
    %202 = vmatpush1.bf16.msra.mxu0 %v174
    %203 = vmatprep.subr.bf16.mxu0 0
    %204 = vmatpush1.bf16.msra.mxu0 %v173
    %205 = vmatprep.subr.bf16.mxu0 0
    %206 = vmatpush2.bf16.msra.mxu0 0
    %207 = vmatprep.subr.bf16.mxu0 0
    %208 = vmatpush2.bf16.msra.mxu0 0
    %209 = vmatprep.subr.bf16.mxu0 0
    %210 = vmatpush2.bf16.msra.mxu0 0
    %211 = vmatprep.subr.bf16.mxu0 0
    %212 = vmatpush2.bf16.msra.mxu0 0
    %213 = vmatprep.subr.bf16.mxu0 0
    %214 = vmatpush2.bf16.msra.mxu0 0
    %215 = vmatprep.subr.bf16.mxu0 0
    %216 = vmatpush2.bf16.msra.mxu0 0
    %217 = vmatprep.subr.bf16.mxu0 0
    %218 = vmatpush2.bf16.msra.mxu0 0
    %219 = vmatprep.subr.bf16.mxu0 0
    %220 = vmatpush2.bf16.msra.mxu0 0
    %221 = vmatprep.mubr.bf16.mxu0 0
    %222 = vmatmul.mubr.bf16.gmra.mxu0 %v124
    %v223 = vpop.f32.mrf.mxu0
    %v224 = vadd.f32 0.0, %v223
    %v225 = vpop.f32.mrf.mxu0
    %v226 = vpop.f32.mrf.mxu0
    %v227 = vadd.f32 0.0, %v226
    %v228 = vpop.f32.mrf.mxu0
    %229 = vdwg.mxu0
    %v230 = vadd.f32 %v122, %v224
    %v231 = vadd.f32 %v123, %v227
    %232 = vst.msk [vmem:[#allocation2] sm:$0xff] %vm59, %v230
    %233 = vst.msk [vmem:[#allocation2 + $0x8] sm:$0xff] %vm59, %v231
    // Predicated region
    $region26: #{tpu_custom_call.1} parent=1 // pred_check
      %p234 = pneg %p22
    $region27: #{tpu_custom_call.1} parent=1 // pred_check_branch
      %236 = sbr.rel (%p234) target = $region29
    $region28: #{tpu_custom_call.1} parent=1 // pred_region
      %v237 = vld [vmem:[#allocation2] sm:$0xff]
      %v238 = vld [vmem:[#allocation2 + $0x8] sm:$0xff]
      %v239 = vld [vmem:[%s4] sm:$0x1]
      %v241 = vlaneseq
      %v242 = vshrl.u32 %v241, 7
      %v243 = vsub.s32 0, %v242
      %v244 = vrot.slane %v239, %v243
      %v246 = vadd.f32 %v237, %v244
      %v247 = vadd.f32 %v238, %v244
      %248 = vst.msk [vmem:[#allocation2] sm:$0xff] %vm59, %v246
      %249 = vst.msk [vmem:[#allocation2 + $0x8] sm:$0xff] %vm59, %v247
    $region29: #{tpu_custom_call.1} parent=1 // pred_fallthru
      _
    // Predicated region
    $region30: #{tpu_custom_call.1} parent=1 // pred_check
      _
    $region31: #{tpu_custom_call.1} parent=1 // pred_check_branch
      %251 = sbr.rel (0) target = $region33
    $region32: #{tpu_custom_call.1} parent=1 // pred_region
      %s253 = ssub.s32 256, 256
      %254 = vsyncadd [#allocation3], %s253
      %s255 = sshll.u32 [#allocation2], 4
      %s256 = int_to_ptr.vmem [resolvable:$true] %s255
      %261 = dma.vmem_to_hbm [thread:$0]  %s256, 256, %s5, [#allocation3], 128, 128, 8
    $region33: #{tpu_custom_call.1} parent=1 // pred_fallthru
      _
    // Predicated region
    $region34: #{tpu_custom_call.1} parent=1 // pred_check
      _
    $region35: #{tpu_custom_call.1} parent=1 // pred_check_branch
      %263 = sbr.rel (0) target = $region37
    $region36: #{tpu_custom_call.1} parent=1 // pred_region
      %264 = dma.done [#allocation3], 256
    $region37: #{tpu_custom_call.1} parent=1 // pred_fallthru
      _
    %265 = vsyncpa [#allocation3], 1

</llo_original>
